<compile_context>
chip_gen: v7x
topology: tpu7x:2x2x1
jax: 0.10.0
libtpu: 0.0.40
codegen_flags: <defaults>
</compile_context>

<pallas_src>
import jax
import jax.numpy as jnp
import numpy as np
from jax.experimental import pallas as pl
from jax.experimental.pallas import tpu as pltpu


def _vmem_budget():
    """Generation-aware (working-set budget, scoped-limit cap) in bytes."""
    cap = 64 << 20                      # conservative fallback = v7x-class VMEM
    try:
        info = pltpu.get_tpu_info()
        cap = int(getattr(info, "vmem_capacity_bytes", cap))
    except Exception:
        pass
    if cap <= (64 << 20):               # v7x: 64 MiB physical per TensorCore
        return 24 << 20, 48 << 20
    return 48 << 20, 96 << 20           # v5e / v6e: 128 MiB physical


def _pick_tile(hw, c, in_bytes, tgt_bytes, budget_bytes, max_lanes=1 << 17):
    """Largest 128-multiple lane tile whose working set fits the VMEM budget."""
    # Per-lane bytes: double-buffered logits + double-buffered targets
    # + f32 intermediates (shifted C×T plus a handful of (1,T) rows).
    per_lane = 2 * c * in_bytes + 2 * tgt_bytes + (c + 8) * 4
    t_budget = max(128, (budget_bytes // per_lane) // 128 * 128)
    hw128 = -(-hw // 128) * 128
    return int(min(t_budget, hw128, max_lanes))


def _make_kernel(C, T, hw_valid, needs_mask, n_inner):
    def kernel(x_ref, t_ref, out_ref):
        # x_ref:   (1, C, T) logits tile for one batch element
        # t_ref:   (1, 1, T) int targets tile
        # out_ref: (1, 1, 128) f32 lane-dense NLL accumulator (resident over inner axis)
        k = pl.program_id(2)

        @pl.when(k == 0)
        def _():
            out_ref[...] = jnp.zeros_like(out_ref)

        x_raw = x_ref[0]                                   # (C, T) native dtype
        tgt = t_ref[0].astype(jnp.int32)                   # (1, T)

        # Class-max and one-hot pick in the native dtype (both exact; bf16 inputs
        # get 2x VPU width on v6e/v7x).  The pick uses the *raw* tile so the f32
        # `shifted` temporary below is consumed only by exp.
        x_max = jnp.max(x_raw, axis=0, keepdims=True)      # (1, T)
        class_ids = jax.lax.broadcasted_iota(jnp.int32, (C, T), 0)
        x_tgt = jnp.sum(jnp.where(class_ids == tgt, x_raw, 0.0),
                        axis=0, keepdims=True)             # (1, T)

        # f32 exp/log path: per-pixel NLL = log(sum exp(x - max)) - (x[t] - max).
        x_max_f = x_max.astype(jnp.float32)
        shifted = x_raw.astype(jnp.float32) - x_max_f      # (C, T) f32, exp-only
        denom = jnp.sum(jnp.exp(shifted), axis=0, keepdims=True)        # (1, T)
        nll_px = jnp.log(denom) - (x_tgt.astype(jnp.float32) - x_max_f)  # (1, T)

        if needs_mask:
            c = pl.program_id(1)
            start = (c * n_inner + k) * T
            col = jax.lax.broadcasted_iota(jnp.int32, (1, T), 1)
            nll_px = jnp.where(start + col < hw_valid, nll_px, 0.0)

        # Lane-dense accumulation: fold T lanes into a 128-lane partial sum
        # (no T-wide cross-lane reduce, no scalar broadcast).
        partial = jnp.sum(nll_px.reshape(T // 128, 128), axis=0)        # (128,)
        out_ref[...] += partial.reshape(1, 1, 128)

    return kernel


def cross_entropy_loss_2d(inputs, targets):
    """inputs: (N, C, H, W) float logits; targets: (N, H, W) int class indices.

    Matches nn.NLLLoss(weight=None, reduction='mean')(log_softmax(inputs, 1), targets).
    """
    # TODO(synk): per-class `weight` rescaling and NLLLoss's ignore_index=-100 are not
    # implemented (only the module's default weight=None / no-ignore path).
    N, C, H, W = inputs.shape
    HW = H * W

    x = inputs.reshape(N, C, HW)
    if x.dtype not in (jnp.float32, jnp.bfloat16):
        x = x.astype(jnp.float32)            # bf16 inputs stay bf16 (halved HBM traffic)
    in_bytes = np.dtype(x.dtype).itemsize

    tgt_dtype = jnp.int16 if C <= 32767 else jnp.int32
    tgt_bytes = np.dtype(tgt_dtype).itemsize
    t = targets.reshape(N, 1, HW).astype(tgt_dtype)

    budget, limit_cap = _vmem_budget()
    T = _pick_tile(HW, C, in_bytes, tgt_bytes, budget)

    # Pad the spatial axis up to a multiple of T (masked in-kernel) — never a
    # whole-image fallback block.
    HW_pad = -(-HW // T) * T
    if HW_pad != HW:
        x = jnp.pad(x, ((0, 0), (0, 0), (0, HW_pad - HW)))
        t = jnp.pad(t, ((0, 0), (0, 0), (0, HW_pad - HW)))
    n_hw = HW_pad // T

    # v7x has 2 TensorCores: when the batch axis alone can't feed both, expose a
    # second parallel axis over spatial chunks (no effect on single-TC v5e/v6e).
    n_chunks = 2 if (N == 1 and n_hw >= 2 and n_hw % 2 == 0) else 1
    n_inner = n_hw // n_chunks

    # Deeper pipelining only when the logits tile is small and the inner loop is
    # long enough to benefit (cheap VMEM, hides DMA jitter).
    logits_tile_bytes = C * T * in_bytes
    if logits_tile_bytes <= (1 << 20) and n_inner >= 3:
        x_spec = pl.BlockSpec((1, C, T), lambda i, c, k: (i, 0, c * n_inner + k),
                              pipeline_mode=pl.Buffered(3))
    else:
        x_spec = pl.BlockSpec((1, C, T), lambda i, c, k: (i, 0, c * n_inner + k))

    working = (2 * C * T * in_bytes + 2 * T * tgt_bytes + (C + 8) * T * 4
               + n_chunks * 128 * 4)
    vmem_limit = int(min(limit_cap, max(32 << 20, working + (8 << 20))))

    kernel = _make_kernel(C, T, HW, HW_pad != HW, n_inner)

    cost = pl.CostEstimate(
        flops=6 * N * C * HW_pad,
        transcendentals=N * (C + 1) * HW_pad,
        bytes_accessed=N * HW_pad * (C * in_bytes + tgt_bytes) + N * n_chunks * 128 * 4,
    )

    out = pl.pallas_call(
        kernel,
        out_shape=jax.ShapeDtypeStruct((N, n_chunks, 128), jnp.float32),
        grid_spec=pltpu.PrefetchScalarGridSpec(
            num_scalar_prefetch=0,
            grid=(N, n_chunks, n_inner),         # batch / chunk parallel, inner = reduction
            in_specs=[
                x_spec,
                pl.BlockSpec((1, 1, T), lambda i, c, k: (i, 0, c * n_inner + k)),
            ],
            out_specs=pl.BlockSpec((1, 1, 128), lambda i, c, k: (i, c, 0)),
        ),
        compiler_params=pltpu.CompilerParams(
            dimension_semantics=("parallel", "parallel", "arbitrary"),
            vmem_limit_bytes=vmem_limit),
        cost_estimate=cost,
    )(x, t)

    # Tiny final reduce in f32 (padded lanes were masked to zero in-kernel).
    return jnp.sum(out) / jnp.float32(N * HW)


def _reference(inputs, targets):
    N, C, H, W = inputs.shape
    logp = jax.nn.log_softmax(inputs.astype(jnp.float32), axis=1)
    masks = jax.nn.one_hot(targets, C, axis=1, dtype=jnp.float32)
    return -jnp.mean(jnp.sum(logp * masks, axis=1))


if __name__ == "__main__":
    key = jax.random.PRNGKey(0)
    k1, k2 = jax.random.split(key)
    N, C, H, W = 2, 4, 16, 16
    inputs = jax.random.normal(k1, (N, C, H, W), dtype=jnp.float32)
    targets = jax.random.randint(k2, (N, H, W), 0, C, dtype=jnp.int32)

    loss = cross_entropy_loss_2d(inputs, targets)
    loss = jax.block_until_ready(loss)

    ref = jax.block_until_ready(_reference(inputs, targets))
    np.testing.assert_allclose(np.asarray(loss), np.asarray(ref), rtol=1e-5, atol=1e-6)

    print("KERNEL_OK")
</pallas_src>

<mosaic_0001>
module attributes {stable_mosaic.version = 11 : i64} {
  func.func @kernel(%arg0: i32, %arg1: i32, %arg2: i32, %arg3: memref<1x4x256xf32, #tpu.memory_space<vmem>>, %arg4: memref<1x1x256xi16, #tpu.memory_space<vmem>>, %arg5: memref<1x1x128xf32, #tpu.memory_space<vmem>>) attributes {dimension_semantics = [#tpu.dimension_semantics<parallel>, #tpu.dimension_semantics<parallel>, #tpu.dimension_semantics<arbitrary>], iteration_bounds = array<i64: 2, 1, 1>, scalar_prefetch = 0 : i64, scratch_operands = 0 : i64, tpu.core_type = #tpu.core_type<tc>, window_params = [{transform_indices = @transform_0, window_bounds = array<i64: 1, 4, 256>}, {transform_indices = @transform_1, window_bounds = array<i64: 1, 1, 256>}, {transform_indices = @transform_2, window_bounds = array<i64: 1, 1, 128>}]} {
    %c0_i32 = arith.constant 0 : i32
    %0 = arith.cmpi eq, %arg2, %c0_i32 : i32
    %1 = arith.extui %0 : i1 to i32
    %c0_i32_0 = arith.constant 0 : i32
    %2 = arith.cmpi ne, %1, %c0_i32_0 : i32
    scf.if %2 {
      %cst_16 = arith.constant 0.000000e+00 : f32
      %31 = vector.broadcast %cst_16 : f32 to vector<1x1x128xf32>
      %c0_17 = arith.constant 0 : index
      %c0_18 = arith.constant 0 : index
      %c0_19 = arith.constant 0 : index
      %32 = vector.load %arg5[%c0_17, %c0_18, %c0_19] : memref<1x1x128xf32, #tpu.memory_space<vmem>>, vector<1x1x128xf32>
      tpu.vector_store %arg5[%c0_17, %c0_18, %c0_19], %31 {strides = array<i32>} : memref<1x1x128xf32, #tpu.memory_space<vmem>>, vector<1x1x128xf32>,
    } else {
    }
    %c0 = arith.constant 0 : index
    %c0_1 = arith.constant 0 : index
    %c0_2 = arith.constant 0 : index
    %3 = vector.load %arg3[%c0, %c0_1, %c0_2] : memref<1x4x256xf32, #tpu.memory_space<vmem>>, vector<1x4x256xf32>
    %4 = vector.shape_cast %3 : vector<1x4x256xf32> to vector<4x256xf32>
    %c0_3 = arith.constant 0 : index
    %c0_4 = arith.constant 0 : index
    %c0_5 = arith.constant 0 : index
    %5 = vector.load %arg4[%c0_3, %c0_4, %c0_5] : memref<1x1x256xi16, #tpu.memory_space<vmem>>, vector<1x1x256xi16>
    %6 = vector.shape_cast %5 : vector<1x1x256xi16> to vector<1x256xi16>
    %7 = arith.extsi %6 : vector<1x256xi16> to vector<1x256xi32>
    %cst = arith.constant dense<0xFF800000> : vector<256xf32>
    %8 = vector.multi_reduction <maximumf>, %4, %cst [0] : vector<4x256xf32> to vector<256xf32>
    %9 = vector.shape_cast %8 : vector<256xf32> to vector<1x256xf32>
    %10 = tpu.iota {dimensions = array<i32: 0>} : vector<4x256xi32>
    %11 = vector.broadcast %7 : vector<1x256xi32> to vector<4x256xi32>
    %12 = arith.cmpi eq, %10, %11 : vector<4x256xi32>
    %cst_6 = arith.constant 0.000000e+00 : f32
    %13 = vector.broadcast %cst_6 : f32 to vector<4x256xf32>
    %14 = arith.select %12, %4, %13 : vector<4x256xi1>, vector<4x256xf32>
    %cst_7 = arith.constant dense<0.000000e+00> : vector<256xf32>
    %15 = vector.multi_reduction <add>, %14, %cst_7 [0] : vector<4x256xf32> to vector<256xf32>
    %16 = vector.shape_cast %15 : vector<256xf32> to vector<1x256xf32>
    %17 = vector.broadcast %9 : vector<1x256xf32> to vector<4x256xf32>
    %18 = arith.subf %4, %17 : vector<4x256xf32>
    %19 = math.exp %18 : vector<4x256xf32>
    %cst_8 = arith.constant dense<0.000000e+00> : vector<256xf32>
    %20 = vector.multi_reduction <add>, %19, %cst_8 [0] : vector<4x256xf32> to vector<256xf32>
    %21 = vector.shape_cast %20 : vector<256xf32> to vector<1x256xf32>
    %22 = math.log %21 : vector<1x256xf32>
    %23 = arith.subf %16, %9 : vector<1x256xf32>
    %24 = arith.subf %22, %23 : vector<1x256xf32>
    %25 = vector.shape_cast %24 : vector<1x256xf32> to vector<2x128xf32>
    %cst_9 = arith.constant dense<0.000000e+00> : vector<128xf32>
    %26 = vector.multi_reduction <add>, %25, %cst_9 [0] : vector<2x128xf32> to vector<128xf32>
    %c0_10 = arith.constant 0 : index
    %c0_11 = arith.constant 0 : index
    %c0_12 = arith.constant 0 : index
    %27 = vector.load %arg5[%c0_10, %c0_11, %c0_12] : memref<1x1x128xf32, #tpu.memory_space<vmem>>, vector<1x1x128xf32>
    %28 = vector.shape_cast %26 : vector<128xf32> to vector<1x1x128xf32>
    %29 = arith.addf %27, %28 : vector<1x1x128xf32>
    %c0_13 = arith.constant 0 : index
    %c0_14 = arith.constant 0 : index
    %c0_15 = arith.constant 0 : index
    %30 = vector.load %arg5[%c0_13, %c0_14, %c0_15] : memref<1x1x128xf32, #tpu.memory_space<vmem>>, vector<1x1x128xf32>
    tpu.vector_store %arg5[%c0_13, %c0_14, %c0_15], %29 {strides = array<i32>} : memref<1x1x128xf32, #tpu.memory_space<vmem>>, vector<1x1x128xf32>,
    return
  }
  func.func @transform_0(%arg0: i32, %arg1: i32, %arg2: i32) -> (i32, i32, i32) {
    %c1_i32 = arith.constant 1 : i32
    %0 = arith.muli %arg1, %c1_i32 : i32
    %1 = arith.addi %0, %arg2 : i32
    %c0_i32 = arith.constant 0 : i32
    %c0_i32_0 = arith.constant 0 : i32
    return %arg0, %c0_i32, %1 : i32, i32, i32
  }
  func.func @transform_1(%arg0: i32, %arg1: i32, %arg2: i32) -> (i32, i32, i32) {
    %c1_i32 = arith.constant 1 : i32
    %0 = arith.muli %arg1, %c1_i32 : i32
    %1 = arith.addi %0, %arg2 : i32
    %c0_i32 = arith.constant 0 : i32
    %c0_i32_0 = arith.constant 0 : i32
    return %arg0, %c0_i32, %1 : i32, i32, i32
  }
  func.func @transform_2(%arg0: i32, %arg1: i32, %arg2: i32) -> (i32, i32, i32) {
    %c0_i32 = arith.constant 0 : i32
    %c0_i32_0 = arith.constant 0 : i32
    return %arg0, %arg1, %c0_i32 : i32, i32, i32
  }
}

</mosaic_0001>

<llo_original>
// kernel: tpu_custom_call.1
$region0: #{tpu_custom_call.1}
  #allocation0 [shape = 'u32[]', space=smem, size = 0x4, offset = 0x4, fixed_abs, tag = 'smem constant byte address 0x4 - core index']
  #allocation1 [shape = 'u32[144,128]{1,0:T(1,128)}', space=vmem, size = 0x12000, scoped, tag = 'internal scratch']
  %s0 = inlined_call_operand.hbm [shape: f32[2,4,256], index: 0, kind: input, shape index: {}]
  %s1 = inlined_call_operand.vmem [shape: s16[2,1,256], index: 1, kind: input, shape index: {}]
  %s2 = inlined_call_operand.hbm [shape: f32[2,1,128], index: 2, kind: output, shape index: {}]
  %s3 = sld [smem:[#allocation0]]
  $region49: #{tpu_custom_call.1} parent=0
    _
  %s5 = ssub.s32 1, %s3
  %s6 = scalar_select 0, %s5, %s3
  $region1: #{tpu_custom_call.1} parent=0
    #allocation2 [shape = 'u8[8192]{0}', space=vmem, size = 0x2000, scoped, tag = 'input window, operand 0']
    #allocation3 [shape = 's32[2]{0}', space=sflag, size = 0x8, scoped, tag = 'scoped memory for tpu_custom_call.1']
    #allocation4 [shape = 's32[2]{0}', space=sflag, size = 0x8, scoped, tag = 'scoped memory for tpu_custom_call.1']
    #allocation5 [shape = 'u8[1024]{0}', space=vmem, size = 0x400, scoped, tag = 'output window, operand 0']
    %7 = vsyncpa [#allocation3], 0
    %s8 = scalar_lea.sflag [#allocation3], 1
    %9 = vsyncpa %s8, 0
    %10 = vsyncpa [#allocation4], 0
    %s11 = scalar_lea.sflag [#allocation4], 1
    %12 = vsyncpa %s11, 0
    loop: start=0, step=1, limit=4
    $region2: #{tpu_custom_call.1} parent=1 // loop_pre_header
      _
    $region3: #{tpu_custom_call.1} parent=1 // loop_header
      %s14 = sphi 0, %s18
      %p15 = scmp.ge.s32.totalorder %s14, 4
      %s21 = sphi 0, %s40
      %s22 = sphi 0, %s36
      %s23 = sphi 0, %s32
      %s24 = sphi 0, %s21
      %s25 = sphi 0, %s22
      %s26 = sphi 0, %s23
      %s27 = sphi 0, %s24
      %s28 = sphi 0, %s25
      %s29 = sphi 0, %s26
      %s47 = sphi 0, %s49
      %s50 = sphi 0, %s47
      %s51 = sphi 0, %s50
      %s67 = sphi 0, %s51
      %s77 = sphi 0, %s79
      %s80 = sphi 0, %s77
      %s81 = sphi 0, %s80
      %s97 = sphi 0, %s81
      %s105 = sphi 0, %s107
      %s108 = sphi 0, %s105
      %s109 = sphi 0, %s108
      %s125 = sphi 0, %s109
    $region4: #{tpu_custom_call.1} parent=1 // loop_header_branch
      %17 = sbr.rel (%p15) target = $region8
    $region5: #{tpu_custom_call.1} parent=1 // loop_body
      %s19 = ssub.s32 %s14, 1
      %s20 = ssub.s32 %s14, 2
      %s30 = sadd.s32 1, %s23
      %p31 = scmp.ge.s32.totalorder %s30, 1
      %s32 = scalar_select %p31, 0, %s30
      %s33 = sadd.s32 1, %s22
      %s34 = scalar_select %p31, %s33, %s22
      %p35 = scmp.ge.s32.totalorder %s34, 1
      %s36 = scalar_select %p35, 0, %s34
      %s37 = sadd.s32 1, %s21
      %s38 = scalar_select %p35, %s37, %s21
      %p39 = scmp.ge.s32.totalorder %s38, 2
      %s40 = scalar_select %p39, 0, %s38
      %s41 = sadd.s32 %s22, %s23
      %s42 = sadd.s32 %s36, %s32
      %s43 = ssub.s32 %s21, %s40
      %s44 = ssub.s32 %s41, %s42
      %s45 = sor.u32 %s43, %s44
      %p46 = scmp.eq.s32.totalorder %s45, 0
      %s48 = sadd.s32 %s47, 1
      %s49 = scalar_select %p46, %s47, %s48
      %p52 = pneg %p46
      %p53 = scmp.eq.s32.totalorder %s14, 1
      %p54 = por %p52, %p53
      %p55 = scmp.ne.s32.totalorder %s47, %s50
      %p56 = scmp.eq.s32.totalorder %s14, 0
      %p57 = por %p55, %p56
      %p58 = scmp.ne.s32.totalorder %s47, %s50
      %p59 = scmp.eq.s32.totalorder %s19, 1
      %p60 = por %p58, %p59
      %p61 = scmp.ne.s32.totalorder %s50, %s51
      %p62 = scmp.eq.s32.totalorder %s19, 0
      %p63 = por %p61, %p62
      %p64 = scmp.ne.s32.totalorder %s50, %s51
      %p65 = scmp.eq.s32.totalorder %s20, 1
      %p66 = por %p64, %p65
      %p68 = scmp.ne.s32.totalorder %s51, %s67
      %p69 = scmp.eq.s32.totalorder %s20, 0
      %p70 = por %p68, %p69
      %s71 = sadd.s32 %s22, %s23
      %s72 = sadd.s32 %s36, %s32
      %s73 = ssub.s32 %s21, %s40
      %s74 = ssub.s32 %s71, %s72
      %s75 = sor.u32 %s73, %s74
      %p76 = scmp.eq.s32.totalorder %s75, 0
      %s78 = sadd.s32 %s77, 1
      %s79 = scalar_select %p76, %s77, %s78
      %p82 = pneg %p76
      %p83 = scmp.eq.s32.totalorder %s14, 1
      %p84 = por %p82, %p83
      %p85 = scmp.ne.s32.totalorder %s77, %s80
      %p86 = scmp.eq.s32.totalorder %s14, 0
      %p87 = por %p85, %p86
      %p88 = scmp.ne.s32.totalorder %s77, %s80
      %p89 = scmp.eq.s32.totalorder %s19, 1
      %p90 = por %p88, %p89
      %p91 = scmp.ne.s32.totalorder %s80, %s81
      %p92 = scmp.eq.s32.totalorder %s19, 0
      %p93 = por %p91, %p92
      %p94 = scmp.ne.s32.totalorder %s80, %s81
      %p95 = scmp.eq.s32.totalorder %s20, 1
      %p96 = por %p94, %p95
      %p98 = scmp.ne.s32.totalorder %s81, %s97
      %p99 = scmp.eq.s32.totalorder %s20, 0
      %p100 = por %p98, %p99
      %s101 = ssub.s32 %s21, %s40
      %s102 = ssub.s32 %s22, %s36
      %s103 = sor.u32 %s101, %s102
      %p104 = scmp.eq.s32.totalorder %s103, 0
      %s106 = sadd.s32 %s105, 1
      %s107 = scalar_select %p104, %s105, %s106
      %p110 = pneg %p104
      %p111 = scmp.eq.s32.totalorder %s14, 1
      %p112 = por %p110, %p111
      %p113 = scmp.ne.s32.totalorder %s105, %s108
      %p114 = scmp.eq.s32.totalorder %s14, 0
      %p115 = por %p113, %p114
      %p116 = scmp.ne.s32.totalorder %s105, %s108
      %p117 = scmp.eq.s32.totalorder %s19, 1
      %p118 = por %p116, %p117
      %p119 = scmp.ne.s32.totalorder %s108, %s109
      %p120 = scmp.eq.s32.totalorder %s19, 0
      %p121 = por %p119, %p120
      %p122 = scmp.ne.s32.totalorder %s108, %s109
      %p123 = scmp.eq.s32.totalorder %s20, 1
      %p124 = por %p122, %p123
      %p126 = scmp.ne.s32.totalorder %s109, %s125
      %p127 = scmp.eq.s32.totalorder %s20, 0
      %p128 = por %p126, %p127
      %p129 = scmp.le.s32.totalorder 1, %s14
      %p130 = scmp.lt.s32.totalorder %s14, 3
      %p131 = pnand %p129, %p130
      %p132 = pneg %p131
      // Predicated region
      $region9: #{tpu_custom_call.1} parent=5 // pred_check
        _
      $region10: #{tpu_custom_call.1} parent=5 // pred_check_branch
        %134 = sbr.rel (%p131) target = $region12
      $region11: #{tpu_custom_call.1} parent=5 // pred_region
        %s135 = ssub.s32 %s14, 1
      $region12: #{tpu_custom_call.1} parent=5 // pred_fallthru
        _
      %p136 = scmp.lt.s32.totalorder %s14, 2
      // Predicated region
      $region13: #{tpu_custom_call.1} parent=5 // pred_check
        %p137 = pneg %p136
      $region14: #{tpu_custom_call.1} parent=5 // pred_check_branch
        %139 = sbr.rel (%p137) target = $region16
      $region15: #{tpu_custom_call.1} parent=5 // pred_region
        // Predicated region
        $region17: #{tpu_custom_call.1} parent=15 // pred_check
          %p140 = pneg %p57
        $region18: #{tpu_custom_call.1} parent=15 // pred_check_branch
          %142 = sbr.rel (%p140) target = $region20
        $region19: #{tpu_custom_call.1} parent=15 // pred_region
          %s143 = sand.u32 %s47, 1
          %s144 = scalar_lea.sflag [#allocation3], %s143
          %s145 = sand.u32 %s47, 1
          %s146 = smul.addr %s145, 8
          %s147 = scalar_lea.vmem [#allocation2], %s146
          %s148 = sadd.s32 %s22, %s23
          %s149 = smul.u32 2, %s148
          %s151 = ssub.s32 128, 128
          %152 = vsyncadd %s144, %s151
          %s153 = smul.addr %s21, 2
          %s154 = sadd.s32 %s149, %s153
          %s155 = smul.addr %s154, 64
          %s156 = scalar_lea.hbm %s0, %s155
          %s158 = sshll.u32 %s147, 4
          %s159 = int_to_ptr.vmem [resolvable:$true] %s158
          %161 = dma.hbm_to_vmem [thread:$0]  %s156, 128, %s159, %s144
        $region20: #{tpu_custom_call.1} parent=15 // pred_fallthru
          _
        // Predicated region
        $region21: #{tpu_custom_call.1} parent=15 // pred_check
          %p162 = pneg %p87
        $region22: #{tpu_custom_call.1} parent=15 // pred_check_branch
          %164 = sbr.rel (%p162) target = $region24
        $region23: #{tpu_custom_call.1} parent=15 // pred_region
          %s165 = sadd.s32 %s22, %s23
          %s166 = smul.u32 2, %s165
          %p167 = scmp.lt.s32.totalorder %s21, 1
          %s168 = scalar_select %p167, %s21, 1
          %p169 = scmp.lt.s32.totalorder %s166, 1
          %s170 = scalar_select %p169, %s166, 1
          %s171 = smul.addr %s168, 2
          %s172 = sadd.s32 %s170, %s171
          %s173 = scalar_lea.vmem %s1, %s172
          %s174 = sadd.s32 %s22, %s23
          %s175 = smul.u32 2, %s174
        $region24: #{tpu_custom_call.1} parent=15 // pred_fallthru
          _
      $region16: #{tpu_custom_call.1} parent=5 // pred_fallthru
        _
      %p176 = scmp.le.s32.totalorder 1, %s14
      %p177 = scmp.lt.s32.totalorder %s14, 3
      %p178 = pnand %p176, %p177
      %p179 = pneg %p178
      // Predicated region
      $region25: #{tpu_custom_call.1} parent=5 // pred_check
        _
      $region26: #{tpu_custom_call.1} parent=5 // pred_check_branch
        %181 = sbr.rel (%p178) target = $region28
      $region27: #{tpu_custom_call.1} parent=5 // pred_region
        %s182 = ssub.s32 %s14, 1
        %s183 = sand.u32 %s50, 1
        %s184 = scalar_lea.sflag [#allocation3], %s183
        %s185 = sand.u32 %s50, 1
        %s186 = smul.addr %s185, 8
        %s187 = scalar_lea.vmem [#allocation2], %s186
        // Predicated region
        $region29: #{tpu_custom_call.1} parent=27 // pred_check
          %p188 = pneg %p63
        $region30: #{tpu_custom_call.1} parent=27 // pred_check_branch
          %190 = sbr.rel (%p188) target = $region32
        $region31: #{tpu_custom_call.1} parent=27 // pred_region
          %191 = dma.done %s184, 128
        $region32: #{tpu_custom_call.1} parent=27 // pred_fallthru
          _
        %s192 = sand.u32 %s50, 1
        %s193 = scalar_lea.sflag [#allocation3], %s192
        %s194 = sand.u32 %s50, 1
        %s195 = smul.addr %s194, 8
        %s196 = scalar_lea.vmem [#allocation2], %s195
        %p197 = pneg %p63
        %p198 = pneg %p60
        %s199 = sadd.s32 %s25, %s26
        %s200 = smul.u32 2, %s199
        %p201 = scmp.lt.s32.totalorder %s24, 1
        %s202 = scalar_select %p201, %s24, 1
        %p203 = scmp.lt.s32.totalorder %s200, 1
        %s204 = scalar_select %p203, %s200, 1
        %s205 = smul.addr %s202, 2
        %s206 = sadd.s32 %s204, %s205
        %s207 = scalar_lea.vmem %s1, %s206
        %p208 = pneg %p93
        %p209 = pneg %p90
        %p210 = pneg %p121
        %p211 = pneg %p118
        %s212 = sand.u32 %s108, 1
        %s213 = scalar_lea.sflag [#allocation4], %s212
        %s214 = sand.u32 %s108, 1
        %s215 = scalar_lea.vmem [#allocation5], %s214
        %s216 = sadd.s32 %s25, %s26
        %s217 = smul.u32 2, %s216
        %s218 = sadd.s32 %s25, %s26
        %s219 = smul.u32 2, %s218
        %p220 = scmp.lt.s32.totalorder %s24, 1
        %s221 = scalar_select %p220, %s24, 1
        %p222 = scmp.lt.s32.totalorder %s219, 1
        %s223 = scalar_select %p222, %s219, 1
        %s224 = smul.addr %s221, 2
        %s225 = sadd.s32 %s223, %s224
        %s226 = scalar_lea.vmem %s1, %s225
        %s227 = sadd.s32 %s25, %s26
        %s228 = smul.u32 2, %s227
        %p229 = scmp.eq.s32.totalorder %s26, 0
        // Predicated region
        $region33: #{tpu_custom_call.1} parent=27 // pred_check
          %p230 = pneg %p229
        $region34: #{tpu_custom_call.1} parent=27 // pred_check_branch
          %232 = sbr.rel (%p230) target = $region36
        $region35: #{tpu_custom_call.1} parent=27 // pred_region
          %233 = vst [vmem:[%s215] sm:$0x1] 0.0
        $region36: #{tpu_custom_call.1} parent=27 // pred_fallthru
          _
        %v234 = vld [vmem:[%s187] sm:$0xff]
        %v235 = vld [vmem:[%s226] sm:$0x3]
        %v236 = vunpack.c.l.b16 %v235
        %v238 = vcombine.high %v234, %v234
        %vm240 = vcmask 1043456
        %v241 = vsel %vm240, %v234, -inf
        %v242 = vrot.slane %v241, 4
        %v243 = vmax.f32 %v241, %v242
        %v244 = vrot.slane %v243, 2
        %v245 = vmax.f32 %v243, %v244
        %v246 = vrot.slane %v245, 1
        %v247 = vmax.f32 %v245, %v246
        %v248 = vsel %vm240, %v238, -inf
        %v249 = vrot.slane %v248, 4
        %v250 = vmax.f32 %v248, %v249
        %v251 = vrot.slane %v250, 2
        %v252 = vmax.f32 %v250, %v251
        %v253 = vrot.slane %v252, 1
        %v254 = vmax.f32 %v252, %v253
        %v255 = vlaneseq
        %v256 = vshrl.u32 %v255, 7
        %v257 = vlaneseq
        %v258 = vshrl.u32 %v257, 7
        %v259 = vsub.s32 0, %v258
        %v260 = vrot.slane %v236, %v259
        %v261 = vlaneseq
        %v262 = vshrl.u32 %v261, 7
        %v263 = vsub.s32 2, %v262
        %v264 = vrot.slane %v236, %v263
        %v265 = vlaneseq
        %v266 = vshrl.u32 %v265, 7
        %v267 = vsub.s32 0, %v266
        %v268 = vrot.slane %v260, %v267
        %v269 = vlaneseq
        %v270 = vshrl.u32 %v269, 7
        %v271 = vsub.s32 0, %v270
        %v272 = vrot.slane %v264, %v271
        %vm273 = vcmp.eq.s32.totalorder %v256, %v268
        %vm274 = vcmp.eq.s32.totalorder %v256, %v272
        %v275 = vsel %vm273, %v234, 0.0
        %v276 = vsel %vm274, %v238, 0.0
        %v277 = vsel %vm240, %v275, 0.0
        %v278 = vrot.slane %v277, 4
        %v279 = vadd.f32 %v277, %v278
        %v280 = vrot.slane %v279, 2
        %v281 = vadd.f32 %v279, %v280
        %v282 = vrot.slane %v281, 1
        %v283 = vadd.f32 %v281, %v282
        %v284 = vsel %vm240, %v276, 0.0
        %v285 = vrot.slane %v284, 4
        %v286 = vadd.f32 %v284, %v285
        %v287 = vrot.slane %v286, 2
        %v288 = vadd.f32 %v286, %v287
        %v289 = vrot.slane %v288, 1
        %v290 = vadd.f32 %v288, %v289
        %v293 = vcombine.low %v247, %v254
        %v295 = vsub.f32 %v234, %v293
        %v296 = vmul.f32 %v295, 1.442695
        %v297 = vpow.pop %v296
        %v299 = vcombine.high %v297, %v297
        %v301 = vsel %vm240, %v297, 0.0
        %v302 = vrot.slane %v301, 4
        %v303 = vadd.f32 %v301, %v302
        %v304 = vrot.slane %v303, 2
        %v305 = vadd.f32 %v303, %v304
        %v306 = vrot.slane %v305, 1
        %v307 = vadd.f32 %v305, %v306
        %v308 = vsel %vm240, %v299, 0.0
        %v309 = vrot.slane %v308, 4
        %v310 = vadd.f32 %v308, %v309
        %v311 = vrot.slane %v310, 2
        %v312 = vadd.f32 %v310, %v311
        %v313 = vrot.slane %v312, 1
        %v314 = vadd.f32 %v312, %v313
        %v315 = vlog2.pop %v307
        %v316 = vmul.f32 %v315, 0.6931472
        %v317 = vlog2.pop %v314
        %v318 = vmul.f32 %v317, 0.6931472
        %v319 = vsub.f32 %v283, %v247
        %v320 = vsub.f32 %v290, %v254
        %v321 = vsub.f32 %v316, %v319
        %v322 = vsub.f32 %v318, %v320
        %v325 = vcombine.low %v321, %v322
        %v328 = vunpack.c.l.s4 1935823168
        %v329 = vunpack.c.0.s8 %v328
        %v330 = vlaneseq
        %v331 = vshrl.u32 %v330, 7
        %v332 = vsub.s32 %v329, %v331
        %v333 = vrot.slane %v325, %v332
        %vm334 = vcmask 1041408
        %v335 = vsel %vm334, %v333, 0.0
        %v336 = vrot.slane %v335, 4
        %v337 = vadd.f32 %v335, %v336
        %v338 = vrot.slane %v337, 2
        %v339 = vadd.f32 %v337, %v338
        %v340 = vrot.slane %v339, 1
        %v341 = vadd.f32 %v339, %v340
        %v342 = vld [vmem:[%s215] sm:$0x1]
        %v343 = vadd.f32 %v342, %v341
        %344 = vst [vmem:[%s215] sm:$0x1] %v343
        %s345 = sand.u32 %s108, 1
        %s346 = scalar_lea.sflag [#allocation4], %s345
        %s347 = sand.u32 %s108, 1
        %s348 = scalar_lea.vmem [#allocation5], %s347
        // Predicated region
        $region37: #{tpu_custom_call.1} parent=27 // pred_check
          %p349 = pneg %p118
        $region38: #{tpu_custom_call.1} parent=27 // pred_check_branch
          %351 = sbr.rel (%p349) target = $region40
        $region39: #{tpu_custom_call.1} parent=27 // pred_region
          %s353 = ssub.s32 16, 16
          %354 = vsyncadd %s346, %s353
          %s355 = sadd.s32 %s25, %s24
          %s356 = smul.addr %s355, 16
          %s357 = scalar_lea.hbm %s2, %s356
          %s359 = sshll.u32 %s348, 4
          %s360 = int_to_ptr.vmem [resolvable:$true] %s359
          %362 = dma.vmem_to_hbm [thread:$0]  %s360, 16, %s357, %s346
        $region40: #{tpu_custom_call.1} parent=27 // pred_fallthru
          _
      $region28: #{tpu_custom_call.1} parent=5 // pred_fallthru
        _
      %p363 = scmp.le.s32.totalorder 2, %s14
      // Predicated region
      $region41: #{tpu_custom_call.1} parent=5 // pred_check
        %p364 = pneg %p363
      $region42: #{tpu_custom_call.1} parent=5 // pred_check_branch
        %366 = sbr.rel (%p364) target = $region44
      $region43: #{tpu_custom_call.1} parent=5 // pred_region
        %s367 = ssub.s32 %s14, 2
        // Predicated region
        $region45: #{tpu_custom_call.1} parent=43 // pred_check
          %p368 = pneg %p124
        $region46: #{tpu_custom_call.1} parent=43 // pred_check_branch
          %370 = sbr.rel (%p368) target = $region48
        $region47: #{tpu_custom_call.1} parent=43 // pred_region
          %s371 = sand.u32 %s109, 1
          %s372 = scalar_lea.sflag [#allocation4], %s371
          %s373 = sand.u32 %s109, 1
          %s374 = scalar_lea.vmem [#allocation5], %s373
          %375 = dma.done %s372, 16
        $region48: #{tpu_custom_call.1} parent=43 // pred_fallthru
          _
      $region44: #{tpu_custom_call.1} parent=5 // pred_fallthru
        _
    $region6: #{tpu_custom_call.1} parent=1 // loop_footer
      %s18 = sadd.s32 1, %s14
    $region7: #{tpu_custom_call.1} parent=1 // loop_footer_branch
      %13 = sbr.rel target = $region3
    $region8: #{tpu_custom_call.1} parent=1 // loop_exit
      _
    %376 = vsyncpa [#allocation3], 1
    %s377 = scalar_lea.sflag [#allocation3], 1
    %378 = vsyncpa %s377, 1
    %379 = vsyncpa [#allocation4], 1
    %s380 = scalar_lea.sflag [#allocation4], 1
    %381 = vsyncpa %s380, 1

</llo_original>
